<compile_context>
chip_gen: v6e
topology: v6e:2x2x1
jax: 0.10.0
libtpu: 0.0.40
codegen_flags: <defaults>
</compile_context>

<pallas_src>
import jax
import jax.numpy as jnp
from jax.experimental import pallas as pl
from jax.experimental.pallas import tpu as pltpu


def _grad3d_diff_kernel(x_ref, xprev_ref, xnext_ref, out_ref):
    """Centered differences with replicate boundary handling.

    x_ref    : (bc_t, td, h, w)    main input tile
    xprev_ref: (bc_t, 1,  h, w)    plane just below the D tile (clamped)
    xnext_ref: (bc_t, 1,  h, w)    plane just above the D tile (clamped)
    out_ref  : (bc_t, 3, td, h, w) gradients (d/dx, d/dy, d/dz)
    """
    in_dtype = x_ref.dtype
    if jnp.issubdtype(in_dtype, jnp.floating) and jnp.dtype(in_dtype).itemsize < 4:
        cdt = jnp.float32  # difference bf16/fp16 in f32 for accuracy
    else:
        cdt = in_dtype

    x = x_ref[...].astype(cdt)          # (bc_t, td, h, w)
    xp = xprev_ref[...].astype(cdt)     # (bc_t, 1,  h, w)
    xn = xnext_ref[...].astype(cdt)     # (bc_t, 1,  h, w)
    bc_t, td, h, w = x.shape
    half = jnp.asarray(0.5, dtype=cdt)

    # d/dx (W, lane axis): clamped +/-1 neighbours built in-register.
    if w > 1:
        x_wn = jnp.concatenate([x[..., 1:], x[..., w - 1:]], axis=3)   # x[w+1] clamp
        x_wp = jnp.concatenate([x[..., :1], x[..., :w - 1]], axis=3)   # x[w-1] clamp
    else:
        x_wn = x_wp = x
    out_ref[:, 0] = (half * (x_wn - x_wp)).astype(out_ref.dtype)

    # d/dy (H, sublane axis).
    if h > 1:
        x_hn = jnp.concatenate([x[:, :, 1:, :], x[:, :, h - 1:, :]], axis=2)
        x_hp = jnp.concatenate([x[:, :, :1, :], x[:, :, :h - 1, :]], axis=2)
    else:
        x_hn = x_hp = x
    out_ref[:, 1] = (half * (x_hn - x_hp)).astype(out_ref.dtype)

    # d/dz (D, untiled axis): halo planes come from the clamped index maps,
    # so this is correct both at the volume edge and across D tiles.
    if td > 1:
        x_dn = jnp.concatenate([x[:, 1:], xn], axis=1)
        x_dp = jnp.concatenate([xp, x[:, :td - 1]], axis=1)
    else:
        x_dn, x_dp = xn, xp
    out_ref[:, 2] = (half * (x_dn - x_dp)).astype(out_ref.dtype)


def _vmem_capacity_bytes():
    try:
        return int(pltpu.get_tpu_info().vmem_capacity_bytes)
    except Exception:
        return 64 * 1024 * 1024  # conservative fallback (v7x per-core VMEM)


def _choose_tiles(bc, d, h, w, in_bytes, out_bytes, vmem_budget):
    """Pick (bc_tile, d_tile) so double-buffered tiles fit the VMEM budget."""
    plane_in = h * w * in_bytes
    plane_out = h * w * out_bytes

    def step_bytes(bc_t, td):
        # (main + 2 halo planes) input + 3-channel output, x2 double-buffering.
        return 2 * bc_t * ((td + 2) * plane_in + 3 * td * plane_out)

    # d_tile: largest divisor of d whose tile fits the budget (>= 1 always).
    td = 1
    for cand in range(1, d + 1):
        if d % cand == 0 and step_bytes(1, cand) <= vmem_budget:
            td = cand
    n_d = d // td

    # bc_tile: largest divisor of bc with a modest per-step footprint while
    # keeping >= 2 grid steps (so v7x's two TensorCores both get a share).
    soft_cap = min(vmem_budget, 8 * 1024 * 1024)
    bc_t = 1
    for cand in range(1, bc + 1):
        if bc % cand != 0:
            continue
        steps = (bc // cand) * n_d
        if step_bytes(cand, td) <= soft_cap and (steps >= 2 or bc * n_d < 2):
            bc_t = cand
    return bc_t, td


def spatial_gradient3d(image, mode="diff", order=1, *, bc_tile=None, d_tile=None):
    """Pallas equivalent of torchkit SpatialGradient3d forward (diff, order=1).

    image: [B, C, D, H, W]  ->  returns [B, C, 3, D, H, W]
    """
    if image.ndim != 5:
        raise ValueError(f"expected [B, C, D, H, W], got {image.shape}")
    if not (mode == "diff" and order == 1):
        # TODO(synk): 'sobel' mode / order=2 path not implemented.
        raise NotImplementedError("only mode='diff', order=1 is implemented")

    b, c, d, h, w = image.shape
    bc = b * c
    x = image.reshape(bc, d, h, w)

    itemsize = jnp.dtype(image.dtype).itemsize
    vmem_cap = _vmem_capacity_bytes()
    auto_bc_t, auto_td = _choose_tiles(bc, d, h, w, itemsize, itemsize, vmem_cap // 2)
    bc_t = bc_tile if bc_tile is not None else auto_bc_t
    td = d_tile if d_tile is not None else auto_td
    if bc % bc_t != 0 or d % td != 0:
        raise ValueError("bc_tile / d_tile must divide B*C / D")

    grid = (bc // bc_t, d // td)

    in_specs = [
        pl.BlockSpec((bc_t, td, h, w), lambda i, j: (i, j, 0, 0)),
        # Single-plane halos below/above the D tile, clamped at the volume
        # edge (block size 1 along D => block index == element index).
        pl.BlockSpec((bc_t, 1, h, w),
                     lambda i, j: (i, jnp.maximum(j * td - 1, 0), 0, 0)),
        pl.BlockSpec((bc_t, 1, h, w),
                     lambda i, j: (i, jnp.minimum((j + 1) * td, d - 1), 0, 0)),
    ]
    out_specs = pl.BlockSpec((bc_t, 3, td, h, w), lambda i, j: (i, 0, j, 0, 0))

    out = pl.pallas_call(
        _grad3d_diff_kernel,
        out_shape=jax.ShapeDtypeStruct((bc, 3, d, h, w), image.dtype),
        grid=grid,
        in_specs=in_specs,
        out_specs=out_specs,
        compiler_params=pltpu.CompilerParams(
            dimension_semantics=("parallel", "parallel"),
            vmem_limit_bytes=int(vmem_cap * 3 // 4),
        ),
    )(x, x, x)

    return out.reshape(b, c, 3, d, h, w)


def _reference(image):
    """Pure-JAX reference mirroring the PyTorch diff/order=1 semantics."""
    xp = jnp.pad(image, ((0, 0), (0, 0), (1, 1), (1, 1), (1, 1)), mode="edge")
    ctr, lft, rgt = slice(1, -1), slice(0, -2), slice(2, None)
    gx = xp[..., ctr, ctr, rgt] - xp[..., ctr, ctr, lft]
    gy = xp[..., ctr, rgt, ctr] - xp[..., ctr, lft, ctr]
    gz = xp[..., rgt, ctr, ctr] - xp[..., lft, ctr, ctr]
    return 0.5 * jnp.stack([gx, gy, gz], axis=2)


if __name__ == "__main__":
    k0, k1 = jax.random.split(jax.random.PRNGKey(0))

    # Main case: lane-dense W (multiple of 128), auto-chosen tiles.
    x1 = jax.random.uniform(k0, (2, 4, 4, 8, 128), dtype=jnp.float32)
    out1 = jax.block_until_ready(spatial_gradient3d(x1))
    assert out1.shape == (2, 4, 3, 4, 8, 128), out1.shape
    assert jnp.allclose(out1, _reference(x1), atol=1e-6, rtol=1e-6), "mismatch (auto tiles)"

    # Forced D/BC tiling: exercises the cross-tile halo index maps.
    out1b = jax.block_until_ready(spatial_gradient3d(x1, d_tile=2, bc_tile=2))
    assert jnp.allclose(out1b, _reference(x1), atol=1e-6, rtol=1e-6), "mismatch (forced tiles)"

    # Single-plane D tiles: exercises the td == 1 path in the kernel.
    out1c = jax.block_until_ready(spatial_gradient3d(x1, d_tile=1, bc_tile=4))
    assert jnp.allclose(out1c, _reference(x1), atol=1e-6, rtol=1e-6), "mismatch (d_tile=1)"

    # Small, oddly-shaped volume (unaligned lanes/sublanes).
    x2 = jax.random.uniform(k1, (1, 3, 3, 5, 7), dtype=jnp.float32)
    out2 = jax.block_until_ready(spatial_gradient3d(x2))
    assert out2.shape == (1, 3, 3, 3, 5, 7), out2.shape
    assert jnp.allclose(out2, _reference(x2), atol=1e-6, rtol=1e-6), "mismatch (odd shape)"

    # bfloat16 input (differenced in f32 in-kernel, stored back as bf16).
    x3 = jax.random.uniform(k0, (1, 2, 4, 8, 128), dtype=jnp.float32).astype(jnp.bfloat16)
    out3 = jax.block_until_ready(spatial_gradient3d(x3))
    ref3 = _reference(x3.astype(jnp.float32)).astype(jnp.bfloat16)
    assert jnp.allclose(out3.astype(jnp.float32), ref3.astype(jnp.float32),
                        atol=2e-2, rtol=2e-2), "mismatch (bf16)"

    print("KERNEL_OK")
</pallas_src>

<mosaic_0001>
module attributes {stable_mosaic.version = 11 : i64} {
  func.func @_grad3d_diff_kernel(%arg0: i32, %arg1: i32, %arg2: memref<4x4x8x128xf32, #tpu.memory_space<vmem>>, %arg3: memref<4x1x8x128xf32, #tpu.memory_space<vmem>>, %arg4: memref<4x1x8x128xf32, #tpu.memory_space<vmem>>, %arg5: memref<4x3x4x8x128xf32, #tpu.memory_space<vmem>>) attributes {dimension_semantics = [#tpu.dimension_semantics<parallel>, #tpu.dimension_semantics<parallel>], iteration_bounds = array<i64: 2, 1>, scalar_prefetch = 0 : i64, scratch_operands = 0 : i64, tpu.core_type = #tpu.core_type<tc>, window_params = [{transform_indices = @transform_0, window_bounds = array<i64: 4, 4, 8, 128>}, {transform_indices = @transform_1, window_bounds = array<i64: 4, 1, 8, 128>}, {transform_indices = @transform_2, window_bounds = array<i64: 4, 1, 8, 128>}, {transform_indices = @transform_3, window_bounds = array<i64: 4, 3, 4, 8, 128>}]} {
    %c0 = arith.constant 0 : index
    %c0_0 = arith.constant 0 : index
    %c0_1 = arith.constant 0 : index
    %c0_2 = arith.constant 0 : index
    %0 = vector.load %arg2[%c0, %c0_0, %c0_1, %c0_2] : memref<4x4x8x128xf32, #tpu.memory_space<vmem>>, vector<4x4x8x128xf32>
    %c0_3 = arith.constant 0 : index
    %c0_4 = arith.constant 0 : index
    %c0_5 = arith.constant 0 : index
    %c0_6 = arith.constant 0 : index
    %1 = vector.load %arg3[%c0_3, %c0_4, %c0_5, %c0_6] : memref<4x1x8x128xf32, #tpu.memory_space<vmem>>, vector<4x1x8x128xf32>
    %c0_7 = arith.constant 0 : index
    %c0_8 = arith.constant 0 : index
    %c0_9 = arith.constant 0 : index
    %c0_10 = arith.constant 0 : index
    %2 = vector.load %arg4[%c0_7, %c0_8, %c0_9, %c0_10] : memref<4x1x8x128xf32, #tpu.memory_space<vmem>>, vector<4x1x8x128xf32>
    %3 = vector.extract_strided_slice %0 {offsets = [0, 0, 0, 1], sizes = [4, 4, 8, 127], strides = [1, 1, 1, 1]} : vector<4x4x8x128xf32> to vector<4x4x8x127xf32>
    %4 = vector.extract_strided_slice %0 {offsets = [0, 0, 0, 127], sizes = [4, 4, 8, 1], strides = [1, 1, 1, 1]} : vector<4x4x8x128xf32> to vector<4x4x8x1xf32>
    %5 = tpu.concatenate %3, %4 in 3 : vector<4x4x8x127xf32>, vector<4x4x8x1xf32> -> vector<4x4x8x128xf32>
    %6 = vector.extract_strided_slice %0 {offsets = [0, 0, 0, 0], sizes = [4, 4, 8, 1], strides = [1, 1, 1, 1]} : vector<4x4x8x128xf32> to vector<4x4x8x1xf32>
    %7 = vector.extract_strided_slice %0 {offsets = [0, 0, 0, 0], sizes = [4, 4, 8, 127], strides = [1, 1, 1, 1]} : vector<4x4x8x128xf32> to vector<4x4x8x127xf32>
    %8 = tpu.concatenate %6, %7 in 3 : vector<4x4x8x1xf32>, vector<4x4x8x127xf32> -> vector<4x4x8x128xf32>
    %9 = arith.subf %5, %8 : vector<4x4x8x128xf32>
    %cst = arith.constant 5.000000e-01 : f32
    %10 = vector.broadcast %cst : f32 to vector<4x4x8x128xf32>
    %11 = arith.mulf %10, %9 : vector<4x4x8x128xf32>
    %c0_11 = arith.constant 0 : index
    %c0_12 = arith.constant 0 : index
    %c0_13 = arith.constant 0 : index
    %c0_14 = arith.constant 0 : index
    %c0_15 = arith.constant 0 : index
    %12 = vector.load %arg5[%c0_11, %c0_12, %c0_13, %c0_14, %c0_15] : memref<4x3x4x8x128xf32, #tpu.memory_space<vmem>>, vector<4x1x4x8x128xf32>
    %13 = vector.shape_cast %12 : vector<4x1x4x8x128xf32> to vector<4x4x8x128xf32>
    %14 = vector.shape_cast %11 : vector<4x4x8x128xf32> to vector<4x1x4x8x128xf32>
    tpu.vector_store %arg5[%c0_11, %c0_12, %c0_13, %c0_14, %c0_15], %14 {strides = array<i32>} : memref<4x3x4x8x128xf32, #tpu.memory_space<vmem>>, vector<4x1x4x8x128xf32>,
    %15 = vector.extract_strided_slice %0 {offsets = [0, 0, 1, 0], sizes = [4, 4, 7, 128], strides = [1, 1, 1, 1]} : vector<4x4x8x128xf32> to vector<4x4x7x128xf32>
    %16 = vector.extract_strided_slice %0 {offsets = [0, 0, 7, 0], sizes = [4, 4, 1, 128], strides = [1, 1, 1, 1]} : vector<4x4x8x128xf32> to vector<4x4x1x128xf32>
    %17 = tpu.concatenate %15, %16 in 2 : vector<4x4x7x128xf32>, vector<4x4x1x128xf32> -> vector<4x4x8x128xf32>
    %18 = vector.extract_strided_slice %0 {offsets = [0, 0, 0, 0], sizes = [4, 4, 1, 128], strides = [1, 1, 1, 1]} : vector<4x4x8x128xf32> to vector<4x4x1x128xf32>
    %19 = vector.extract_strided_slice %0 {offsets = [0, 0, 0, 0], sizes = [4, 4, 7, 128], strides = [1, 1, 1, 1]} : vector<4x4x8x128xf32> to vector<4x4x7x128xf32>
    %20 = tpu.concatenate %18, %19 in 2 : vector<4x4x1x128xf32>, vector<4x4x7x128xf32> -> vector<4x4x8x128xf32>
    %21 = arith.subf %17, %20 : vector<4x4x8x128xf32>
    %cst_16 = arith.constant 5.000000e-01 : f32
    %22 = vector.broadcast %cst_16 : f32 to vector<4x4x8x128xf32>
    %23 = arith.mulf %22, %21 : vector<4x4x8x128xf32>
    %c0_17 = arith.constant 0 : index
    %c1 = arith.constant 1 : index
    %c0_18 = arith.constant 0 : index
    %c0_19 = arith.constant 0 : index
    %c0_20 = arith.constant 0 : index
    %24 = vector.load %arg5[%c0_17, %c1, %c0_18, %c0_19, %c0_20] : memref<4x3x4x8x128xf32, #tpu.memory_space<vmem>>, vector<4x1x4x8x128xf32>
    %25 = vector.shape_cast %24 : vector<4x1x4x8x128xf32> to vector<4x4x8x128xf32>
    %26 = vector.shape_cast %23 : vector<4x4x8x128xf32> to vector<4x1x4x8x128xf32>
    tpu.vector_store %arg5[%c0_17, %c1, %c0_18, %c0_19, %c0_20], %26 {strides = array<i32>} : memref<4x3x4x8x128xf32, #tpu.memory_space<vmem>>, vector<4x1x4x8x128xf32>,
    %27 = vector.extract_strided_slice %0 {offsets = [0, 1, 0, 0], sizes = [4, 3, 8, 128], strides = [1, 1, 1, 1]} : vector<4x4x8x128xf32> to vector<4x3x8x128xf32>
    %28 = tpu.concatenate %27, %2 in 1 : vector<4x3x8x128xf32>, vector<4x1x8x128xf32> -> vector<4x4x8x128xf32>
    %29 = vector.extract_strided_slice %0 {offsets = [0, 0, 0, 0], sizes = [4, 3, 8, 128], strides = [1, 1, 1, 1]} : vector<4x4x8x128xf32> to vector<4x3x8x128xf32>
    %30 = tpu.concatenate %1, %29 in 1 : vector<4x1x8x128xf32>, vector<4x3x8x128xf32> -> vector<4x4x8x128xf32>
    %31 = arith.subf %28, %30 : vector<4x4x8x128xf32>
    %cst_21 = arith.constant 5.000000e-01 : f32
    %32 = vector.broadcast %cst_21 : f32 to vector<4x4x8x128xf32>
    %33 = arith.mulf %32, %31 : vector<4x4x8x128xf32>
    %c0_22 = arith.constant 0 : index
    %c2 = arith.constant 2 : index
    %c0_23 = arith.constant 0 : index
    %c0_24 = arith.constant 0 : index
    %c0_25 = arith.constant 0 : index
    %34 = vector.load %arg5[%c0_22, %c2, %c0_23, %c0_24, %c0_25] : memref<4x3x4x8x128xf32, #tpu.memory_space<vmem>>, vector<4x1x4x8x128xf32>
    %35 = vector.shape_cast %34 : vector<4x1x4x8x128xf32> to vector<4x4x8x128xf32>
    %36 = vector.shape_cast %33 : vector<4x4x8x128xf32> to vector<4x1x4x8x128xf32>
    tpu.vector_store %arg5[%c0_22, %c2, %c0_23, %c0_24, %c0_25], %36 {strides = array<i32>} : memref<4x3x4x8x128xf32, #tpu.memory_space<vmem>>, vector<4x1x4x8x128xf32>,
    return
  }
  func.func @transform_0(%arg0: i32, %arg1: i32) -> (i32, i32, i32, i32) {
    %c0_i32 = arith.constant 0 : i32
    %c0_i32_0 = arith.constant 0 : i32
    %c0_i32_1 = arith.constant 0 : i32
    return %arg0, %arg1, %c0_i32, %c0_i32_0 : i32, i32, i32, i32
  }
  func.func @transform_1(%arg0: i32, %arg1: i32) -> (i32, i32, i32, i32) {
    %c4_i32 = arith.constant 4 : i32
    %0 = arith.muli %arg1, %c4_i32 : i32
    %c1_i32 = arith.constant 1 : i32
    %1 = arith.subi %0, %c1_i32 : i32
    %c0_i32 = arith.constant 0 : i32
    %2 = arith.maxsi %1, %c0_i32 : i32
    %c0_i32_0 = arith.constant 0 : i32
    %c0_i32_1 = arith.constant 0 : i32
    %c0_i32_2 = arith.constant 0 : i32
    return %arg0, %2, %c0_i32_0, %c0_i32_1 : i32, i32, i32, i32
  }
  func.func @transform_2(%arg0: i32, %arg1: i32) -> (i32, i32, i32, i32) {
    %c1_i32 = arith.constant 1 : i32
    %0 = arith.addi %arg1, %c1_i32 : i32
    %c4_i32 = arith.constant 4 : i32
    %1 = arith.muli %0, %c4_i32 : i32
    %c3_i32 = arith.constant 3 : i32
    %2 = arith.minsi %1, %c3_i32 : i32
    %c0_i32 = arith.constant 0 : i32
    %c0_i32_0 = arith.constant 0 : i32
    %c0_i32_1 = arith.constant 0 : i32
    return %arg0, %2, %c0_i32, %c0_i32_0 : i32, i32, i32, i32
  }
  func.func @transform_3(%arg0: i32, %arg1: i32) -> (i32, i32, i32, i32, i32) {
    %c0_i32 = arith.constant 0 : i32
    %c0_i32_0 = arith.constant 0 : i32
    %c0_i32_1 = arith.constant 0 : i32
    %c0_i32_2 = arith.constant 0 : i32
    return %arg0, %c0_i32, %arg1, %c0_i32_0, %c0_i32_1 : i32, i32, i32, i32, i32
  }
}

</mosaic_0001>

<llo_original>
// kernel: tpu_custom_call.1
$region0: #{tpu_custom_call.1}
  #allocation0 [shape = 'u32[]', space=smem, size = 0x4, offset = 0x4, fixed_abs, tag = 'smem constant byte address 0x4 - core index']
  #allocation1 [shape = 'u32[144,128]{1,0:T(1,128)}', space=vmem, size = 0x12000, scoped, tag = 'internal scratch']
  %s0 = inlined_call_operand.hbm [shape: f32[8,4,8,128], index: 0, kind: input, shape index: {}]
  %s1 = inlined_call_operand.hbm [shape: f32[8,4,8,128], index: 1, kind: input, shape index: {}]
  %s2 = inlined_call_operand.hbm [shape: f32[8,4,8,128], index: 2, kind: input, shape index: {}]
  %s3 = inlined_call_operand.hbm [shape: f32[8,3,4,8,128], index: 3, kind: output, shape index: {}]
  %s4 = sld [smem:[#allocation0]]
  $region57: #{tpu_custom_call.1} parent=0
    _
  %s6 = ssub.s32 1, %s4
  %s7 = scalar_select 0, %s6, %s4
  $region1: #{tpu_custom_call.1} parent=0
    #allocation2 [shape = 'u8[131072]{0}', space=vmem, size = 0x20000, scoped, tag = 'input window, operand 0']
    #allocation3 [shape = 's32[2]{0}', space=sflag, size = 0x8, scoped, tag = 'scoped memory for tpu_custom_call.1']
    #allocation4 [shape = 's32[2]{0}', space=sflag, size = 0x8, scoped, tag = 'scoped memory for tpu_custom_call.1']
    #allocation5 [shape = 'u8[32768]{0}', space=vmem, size = 0x8000, scoped, tag = 'input window, operand 1']
    #allocation6 [shape = 's32[2]{0}', space=sflag, size = 0x8, scoped, tag = 'scoped memory for tpu_custom_call.1']
    #allocation7 [shape = 'u8[32768]{0}', space=vmem, size = 0x8000, scoped, tag = 'input window, operand 2']
    #allocation8 [shape = 'u8[393216]{0}', space=vmem, size = 0x60000, scoped, tag = 'output window, operand 0']
    %8 = vsyncpa [#allocation3], 0
    %s9 = scalar_lea.sflag [#allocation3], 1
    %10 = vsyncpa %s9, 0
    %11 = vsyncpa [#allocation6], 0
    %s12 = scalar_lea.sflag [#allocation6], 1
    %13 = vsyncpa %s12, 0
    %14 = vsyncpa [#allocation4], 0
    %s15 = scalar_lea.sflag [#allocation4], 1
    %16 = vsyncpa %s15, 0
    loop: start=0, step=1, limit=4
    $region2: #{tpu_custom_call.1} parent=1 // loop_pre_header
      _
    $region3: #{tpu_custom_call.1} parent=1 // loop_header
      %s18 = sphi 0, %s22
      %p19 = scmp.ge.s32.totalorder %s18, 4
      %s25 = sphi 0, %s37
      %s26 = sphi 0, %s33
      %s27 = sphi 0, %s25
      %s28 = sphi 0, %s26
      %s29 = sphi 0, %s27
      %s30 = sphi 0, %s28
      %s42 = sphi 0, %s44
      %s45 = sphi 0, %s42
      %s46 = sphi 0, %s45
      %s62 = sphi 0, %s46
      %s78 = sphi 0, %s80
      %s81 = sphi 0, %s78
      %s82 = sphi 0, %s81
      %s98 = sphi 0, %s82
      %s114 = sphi 0, %s116
      %s117 = sphi 0, %s114
      %s118 = sphi 0, %s117
      %s134 = sphi 0, %s118
      %s142 = sphi 0, %s144
      %s145 = sphi 0, %s142
      %s146 = sphi 0, %s145
      %s162 = sphi 0, %s146
    $region4: #{tpu_custom_call.1} parent=1 // loop_header_branch
      %21 = sbr.rel (%p19) target = $region8
    $region5: #{tpu_custom_call.1} parent=1 // loop_body
      %s23 = ssub.s32 %s18, 1
      %s24 = ssub.s32 %s18, 2
      %s31 = sadd.s32 1, %s26
      %p32 = scmp.ge.s32.totalorder %s31, 1
      %s33 = scalar_select %p32, 0, %s31
      %s34 = sadd.s32 1, %s25
      %s35 = scalar_select %p32, %s34, %s25
      %p36 = scmp.ge.s32.totalorder %s35, 2
      %s37 = scalar_select %p36, 0, %s35
      %s38 = ssub.s32 %s25, %s37
      %s39 = ssub.s32 %s26, %s33
      %s40 = sor.u32 %s38, %s39
      %p41 = scmp.eq.s32.totalorder %s40, 0
      %s43 = sadd.s32 %s42, 1
      %s44 = scalar_select %p41, %s42, %s43
      %p47 = pneg %p41
      %p48 = scmp.eq.s32.totalorder %s18, 1
      %p49 = por %p47, %p48
      %p50 = scmp.ne.s32.totalorder %s42, %s45
      %p51 = scmp.eq.s32.totalorder %s18, 0
      %p52 = por %p50, %p51
      %p53 = scmp.ne.s32.totalorder %s42, %s45
      %p54 = scmp.eq.s32.totalorder %s23, 1
      %p55 = por %p53, %p54
      %p56 = scmp.ne.s32.totalorder %s45, %s46
      %p57 = scmp.eq.s32.totalorder %s23, 0
      %p58 = por %p56, %p57
      %p59 = scmp.ne.s32.totalorder %s45, %s46
      %p60 = scmp.eq.s32.totalorder %s24, 1
      %p61 = por %p59, %p60
      %p63 = scmp.ne.s32.totalorder %s46, %s62
      %p64 = scmp.eq.s32.totalorder %s24, 0
      %p65 = por %p63, %p64
      %s66 = smul.u32 %s26, 4
      %s67 = ssub.s32 %s66, 1
      %p68 = scmp.gt.s32.totalorder %s67, 0
      %s69 = scalar_select %p68, %s67, 0
      %s70 = smul.u32 %s33, 4
      %s71 = ssub.s32 %s70, 1
      %p72 = scmp.gt.s32.totalorder %s71, 0
      %s73 = scalar_select %p72, %s71, 0
      %s74 = ssub.s32 %s25, %s37
      %s75 = ssub.s32 %s69, %s73
      %s76 = sor.u32 %s74, %s75
      %p77 = scmp.eq.s32.totalorder %s76, 0
      %s79 = sadd.s32 %s78, 1
      %s80 = scalar_select %p77, %s78, %s79
      %p83 = pneg %p77
      %p84 = scmp.eq.s32.totalorder %s18, 1
      %p85 = por %p83, %p84
      %p86 = scmp.ne.s32.totalorder %s78, %s81
      %p87 = scmp.eq.s32.totalorder %s18, 0
      %p88 = por %p86, %p87
      %p89 = scmp.ne.s32.totalorder %s78, %s81
      %p90 = scmp.eq.s32.totalorder %s23, 1
      %p91 = por %p89, %p90
      %p92 = scmp.ne.s32.totalorder %s81, %s82
      %p93 = scmp.eq.s32.totalorder %s23, 0
      %p94 = por %p92, %p93
      %p95 = scmp.ne.s32.totalorder %s81, %s82
      %p96 = scmp.eq.s32.totalorder %s24, 1
      %p97 = por %p95, %p96
      %p99 = scmp.ne.s32.totalorder %s82, %s98
      %p100 = scmp.eq.s32.totalorder %s24, 0
      %p101 = por %p99, %p100
      %s102 = sadd.s32 %s26, 1
      %s103 = smul.u32 %s102, 4
      %p104 = scmp.lt.s32.totalorder %s103, 3
      %s105 = scalar_select %p104, %s103, 3
      %s106 = sadd.s32 %s33, 1
      %s107 = smul.u32 %s106, 4
      %p108 = scmp.lt.s32.totalorder %s107, 3
      %s109 = scalar_select %p108, %s107, 3
      %s110 = ssub.s32 %s25, %s37
      %s111 = ssub.s32 %s105, %s109
      %s112 = sor.u32 %s110, %s111
      %p113 = scmp.eq.s32.totalorder %s112, 0
      %s115 = sadd.s32 %s114, 1
      %s116 = scalar_select %p113, %s114, %s115
      %p119 = pneg %p113
      %p120 = scmp.eq.s32.totalorder %s18, 1
      %p121 = por %p119, %p120
      %p122 = scmp.ne.s32.totalorder %s114, %s117
      %p123 = scmp.eq.s32.totalorder %s18, 0
      %p124 = por %p122, %p123
      %p125 = scmp.ne.s32.totalorder %s114, %s117
      %p126 = scmp.eq.s32.totalorder %s23, 1
      %p127 = por %p125, %p126
      %p128 = scmp.ne.s32.totalorder %s117, %s118
      %p129 = scmp.eq.s32.totalorder %s23, 0
      %p130 = por %p128, %p129
      %p131 = scmp.ne.s32.totalorder %s117, %s118
      %p132 = scmp.eq.s32.totalorder %s24, 1
      %p133 = por %p131, %p132
      %p135 = scmp.ne.s32.totalorder %s118, %s134
      %p136 = scmp.eq.s32.totalorder %s24, 0
      %p137 = por %p135, %p136
      %s138 = ssub.s32 %s25, %s37
      %s139 = ssub.s32 %s26, %s33
      %s140 = sor.u32 %s138, %s139
      %p141 = scmp.eq.s32.totalorder %s140, 0
      %s143 = sadd.s32 %s142, 1
      %s144 = scalar_select %p141, %s142, %s143
      %p147 = pneg %p141
      %p148 = scmp.eq.s32.totalorder %s18, 1
      %p149 = por %p147, %p148
      %p150 = scmp.ne.s32.totalorder %s142, %s145
      %p151 = scmp.eq.s32.totalorder %s18, 0
      %p152 = por %p150, %p151
      %p153 = scmp.ne.s32.totalorder %s142, %s145
      %p154 = scmp.eq.s32.totalorder %s23, 1
      %p155 = por %p153, %p154
      %p156 = scmp.ne.s32.totalorder %s145, %s146
      %p157 = scmp.eq.s32.totalorder %s23, 0
      %p158 = por %p156, %p157
      %p159 = scmp.ne.s32.totalorder %s145, %s146
      %p160 = scmp.eq.s32.totalorder %s24, 1
      %p161 = por %p159, %p160
      %p163 = scmp.ne.s32.totalorder %s146, %s162
      %p164 = scmp.eq.s32.totalorder %s24, 0
      %p165 = por %p163, %p164
      %p166 = scmp.le.s32.totalorder 1, %s18
      %p167 = scmp.lt.s32.totalorder %s18, 3
      %p168 = pnand %p166, %p167
      %p169 = pneg %p168
      // Predicated region
      $region9: #{tpu_custom_call.1} parent=5 // pred_check
        _
      $region10: #{tpu_custom_call.1} parent=5 // pred_check_branch
        %171 = sbr.rel (%p168) target = $region12
      $region11: #{tpu_custom_call.1} parent=5 // pred_region
        %s172 = ssub.s32 %s18, 1
      $region12: #{tpu_custom_call.1} parent=5 // pred_fallthru
        _
      %p173 = scmp.lt.s32.totalorder %s18, 2
      // Predicated region
      $region13: #{tpu_custom_call.1} parent=5 // pred_check
        %p174 = pneg %p173
      $region14: #{tpu_custom_call.1} parent=5 // pred_check_branch
        %176 = sbr.rel (%p174) target = $region16
      $region15: #{tpu_custom_call.1} parent=5 // pred_region
        // Predicated region
        $region17: #{tpu_custom_call.1} parent=15 // pred_check
          %p177 = pneg %p52
        $region18: #{tpu_custom_call.1} parent=15 // pred_check_branch
          %179 = sbr.rel (%p177) target = $region20
        $region19: #{tpu_custom_call.1} parent=15 // pred_region
          %s180 = sand.u32 %s42, 1
          %s181 = scalar_lea.sflag [#allocation3], %s180
          %s182 = sand.u32 %s42, 1
          %s183 = smul.addr %s182, 128
          %s184 = scalar_lea.vmem [#allocation2], %s183
          %s185 = smul.u32 4, %s25
          %s186 = smul.u32 4, %s26
          %s188 = ssub.s32 2048, 2048
          %189 = vsyncadd %s181, %s188
          %s190 = smul.addr %s185, 4
          %s191 = sadd.s32 %s186, %s190
          %s192 = smul.addr %s191, 128
          %s193 = scalar_lea.hbm %s0, %s192
          %s194 = sshll.u32 %s184, 4
          %s195 = int_to_ptr.vmem [resolvable:$true] %s194
          %200 = dma.hbm_to_vmem [thread:$0]  %s193, 2048, %s195, %s181, 128, 128, 8
        $region20: #{tpu_custom_call.1} parent=15 // pred_fallthru
          _
        // Predicated region
        $region21: #{tpu_custom_call.1} parent=15 // pred_check
          %p201 = pneg %p88
        $region22: #{tpu_custom_call.1} parent=15 // pred_check_branch
          %203 = sbr.rel (%p201) target = $region24
        $region23: #{tpu_custom_call.1} parent=15 // pred_region
          %s204 = sand.u32 %s18, 1
          %s205 = scalar_lea.sflag [#allocation6], %s204
          %s206 = sand.u32 %s78, 1
          %s207 = smul.addr %s206, 32
          %s208 = scalar_lea.vmem [#allocation5], %s207
          %s209 = smul.u32 %s26, 4
          %s210 = ssub.s32 %s209, 1
          %p211 = scmp.gt.s32.totalorder %s210, 0
          %s212 = scalar_select %p211, %s210, 0
          %s213 = smul.u32 4, %s25
          %s215 = ssub.s32 512, 512
          %216 = vsyncadd %s205, %s215
          %s217 = smul.addr %s213, 4
          %s218 = sadd.s32 %s212, %s217
          %s219 = smul.addr %s218, 128
          %s220 = scalar_lea.hbm %s1, %s219
          %s221 = sshll.u32 %s208, 4
          %s222 = int_to_ptr.vmem [resolvable:$true] %s221
          %227 = dma.hbm_to_vmem [thread:$0]  %s220, 512, %s222, %s205, 512, 128, 8
        $region24: #{tpu_custom_call.1} parent=15 // pred_fallthru
          _
        // Predicated region
        $region25: #{tpu_custom_call.1} parent=15 // pred_check
          %p228 = pneg %p124
        $region26: #{tpu_custom_call.1} parent=15 // pred_check_branch
          %230 = sbr.rel (%p228) target = $region28
        $region27: #{tpu_custom_call.1} parent=15 // pred_region
          %s231 = sand.u32 %s18, 1
          %s232 = scalar_lea.sflag [#allocation6], %s231
          %s233 = sand.u32 %s114, 1
          %s234 = smul.addr %s233, 32
          %s235 = scalar_lea.vmem [#allocation7], %s234
          %s236 = sadd.s32 %s26, 1
          %s237 = smul.u32 %s236, 4
          %p238 = scmp.lt.s32.totalorder %s237, 3
          %s239 = scalar_select %p238, %s237, 3
          %s240 = smul.u32 4, %s25
          %s242 = ssub.s32 512, 512
          %243 = vsyncadd %s232, %s242
          %s244 = smul.addr %s240, 4
          %s245 = sadd.s32 %s239, %s244
          %s246 = smul.addr %s245, 128
          %s247 = scalar_lea.hbm %s2, %s246
          %s248 = sshll.u32 %s235, 4
          %s249 = int_to_ptr.vmem [resolvable:$true] %s248
          %254 = dma.hbm_to_vmem [thread:$0]  %s247, 512, %s249, %s232, 512, 128, 8
        $region28: #{tpu_custom_call.1} parent=15 // pred_fallthru
          _
      $region16: #{tpu_custom_call.1} parent=5 // pred_fallthru
        _
      %p255 = scmp.le.s32.totalorder 1, %s18
      %p256 = scmp.lt.s32.totalorder %s18, 3
      %p257 = pnand %p255, %p256
      %p258 = pneg %p257
      // Predicated region
      $region29: #{tpu_custom_call.1} parent=5 // pred_check
        _
      $region30: #{tpu_custom_call.1} parent=5 // pred_check_branch
        %260 = sbr.rel (%p257) target = $region32
      $region31: #{tpu_custom_call.1} parent=5 // pred_region
        %s261 = ssub.s32 %s18, 1
        %s262 = sand.u32 %s45, 1
        %s263 = scalar_lea.sflag [#allocation3], %s262
        %s264 = sand.u32 %s45, 1
        %s265 = smul.addr %s264, 128
        %s266 = scalar_lea.vmem [#allocation2], %s265
        // Predicated region
        $region33: #{tpu_custom_call.1} parent=31 // pred_check
          %p267 = pneg %p58
        $region34: #{tpu_custom_call.1} parent=31 // pred_check_branch
          %269 = sbr.rel (%p267) target = $region36
        $region35: #{tpu_custom_call.1} parent=31 // pred_region
          %270 = dma.done %s263, 2048
        $region36: #{tpu_custom_call.1} parent=31 // pred_fallthru
          _
        %s271 = sand.u32 %s23, 1
        %s272 = scalar_lea.sflag [#allocation6], %s271
        %s273 = sand.u32 %s81, 1
        %s274 = smul.addr %s273, 32
        %s275 = scalar_lea.vmem [#allocation5], %s274
        // Predicated region
        $region37: #{tpu_custom_call.1} parent=31 // pred_check
          %p276 = pneg %p94
        $region38: #{tpu_custom_call.1} parent=31 // pred_check_branch
          %278 = sbr.rel (%p276) target = $region40
        $region39: #{tpu_custom_call.1} parent=31 // pred_region
          %279 = dma.done %s272, 512
        $region40: #{tpu_custom_call.1} parent=31 // pred_fallthru
          _
        %s280 = sand.u32 %s23, 1
        %s281 = scalar_lea.sflag [#allocation6], %s280
        %s282 = sand.u32 %s117, 1
        %s283 = smul.addr %s282, 32
        %s284 = scalar_lea.vmem [#allocation7], %s283
        // Predicated region
        $region41: #{tpu_custom_call.1} parent=31 // pred_check
          %p285 = pneg %p130
        $region42: #{tpu_custom_call.1} parent=31 // pred_check_branch
          %287 = sbr.rel (%p285) target = $region44
        $region43: #{tpu_custom_call.1} parent=31 // pred_region
          %288 = dma.done %s281, 512
        $region44: #{tpu_custom_call.1} parent=31 // pred_fallthru
          _
        %s289 = sand.u32 %s45, 1
        %s290 = scalar_lea.sflag [#allocation3], %s289
        %s291 = sand.u32 %s45, 1
        %s292 = smul.addr %s291, 128
        %s293 = scalar_lea.vmem [#allocation2], %s292
        %p294 = pneg %p58
        %p295 = pneg %p55
        %s296 = sand.u32 %s23, 1
        %s297 = scalar_lea.sflag [#allocation6], %s296
        %s298 = sand.u32 %s81, 1
        %s299 = smul.addr %s298, 32
        %s300 = scalar_lea.vmem [#allocation5], %s299
        %p301 = pneg %p94
        %p302 = pneg %p91
        %s303 = sand.u32 %s23, 1
        %s304 = scalar_lea.sflag [#allocation6], %s303
        %s305 = sand.u32 %s117, 1
        %s306 = smul.addr %s305, 32
        %s307 = scalar_lea.vmem [#allocation7], %s306
        %p308 = pneg %p130
        %p309 = pneg %p127
        %p310 = pneg %p158
        %p311 = pneg %p155
        %s312 = sand.u32 %s145, 1
        %s313 = scalar_lea.sflag [#allocation4], %s312
        %s314 = sand.u32 %s145, 1
        %s315 = smul.addr %s314, 384
        %s316 = scalar_lea.vmem [#allocation8], %s315
        %s317 = smul.u32 4, %s27
        %s318 = smul.u32 4, %s28
        %s319 = smul.u32 %s28, 4
        %s320 = ssub.s32 %s319, 1
        %p321 = scmp.gt.s32.totalorder %s320, 0
        %s322 = scalar_select %p321, %s320, 0
        %s323 = smul.u32 4, %s27
        %s324 = sadd.s32 %s28, 1
        %s325 = smul.u32 %s324, 4
        %p326 = scmp.lt.s32.totalorder %s325, 3
        %s327 = scalar_select %p326, %s325, 3
        %s328 = smul.u32 4, %s27
        %s329 = smul.u32 4, %s27
        %s330 = smul.u32 4, %s28
        %v331 = vld [vmem:[%s266] sm:$0xff]
        %v332 = vld [vmem:[%s266 + $0x8] sm:$0xff]
        %v333 = vld [vmem:[%s266 + $0x10] sm:$0xff]
        %v334 = vld [vmem:[%s266 + $0x18] sm:$0xff]
        %v335 = vld [vmem:[%s266 + $0x20] sm:$0xff]
        %v336 = vld [vmem:[%s266 + $0x28] sm:$0xff]
        %v337 = vld [vmem:[%s266 + $0x30] sm:$0xff]
        %v338 = vld [vmem:[%s266 + $0x38] sm:$0xff]
        %v339 = vld [vmem:[%s266 + $0x40] sm:$0xff]
        %v340 = vld [vmem:[%s266 + $0x48] sm:$0xff]
        %v341 = vld [vmem:[%s266 + $0x50] sm:$0xff]
        %v342 = vld [vmem:[%s266 + $0x58] sm:$0xff]
        %v343 = vld [vmem:[%s266 + $0x60] sm:$0xff]
        %v344 = vld [vmem:[%s266 + $0x68] sm:$0xff]
        %v345 = vld [vmem:[%s266 + $0x70] sm:$0xff]
        %v346 = vld [vmem:[%s266 + $0x78] sm:$0xff]
        %v347 = vld [vmem:[%s275] sm:$0xff]
        %v348 = vld [vmem:[%s275 + $0x8] sm:$0xff]
        %v349 = vld [vmem:[%s275 + $0x10] sm:$0xff]
        %v350 = vld [vmem:[%s275 + $0x18] sm:$0xff]
        %v351 = vld [vmem:[%s284] sm:$0xff]
        %v352 = vld [vmem:[%s284 + $0x8] sm:$0xff]
        %v353 = vld [vmem:[%s284 + $0x10] sm:$0xff]
        %v354 = vld [vmem:[%s284 + $0x18] sm:$0xff]
        %371 = vrot.lane.b32.xlu0 %v331, 127
        %v372 = vpop.permute.xlu0 %371
        %373 = vrot.lane.b32.xlu0 %v332, 127
        %v374 = vpop.permute.xlu0 %373
        %375 = vrot.lane.b32.xlu0 %v333, 127
        %v376 = vpop.permute.xlu0 %375
        %377 = vrot.lane.b32.xlu0 %v334, 127
        %v378 = vpop.permute.xlu0 %377
        %379 = vrot.lane.b32.xlu0 %v335, 127
        %v380 = vpop.permute.xlu0 %379
        %381 = vrot.lane.b32.xlu0 %v336, 127
        %v382 = vpop.permute.xlu0 %381
        %383 = vrot.lane.b32.xlu0 %v337, 127
        %v384 = vpop.permute.xlu0 %383
        %385 = vrot.lane.b32.xlu0 %v338, 127
        %v386 = vpop.permute.xlu0 %385
        %387 = vrot.lane.b32.xlu0 %v339, 127
        %v388 = vpop.permute.xlu0 %387
        %389 = vrot.lane.b32.xlu0 %v340, 127
        %v390 = vpop.permute.xlu0 %389
        %391 = vrot.lane.b32.xlu0 %v341, 127
        %v392 = vpop.permute.xlu0 %391
        %393 = vrot.lane.b32.xlu0 %v342, 127
        %v394 = vpop.permute.xlu0 %393
        %395 = vrot.lane.b32.xlu0 %v343, 127
        %v396 = vpop.permute.xlu0 %395
        %397 = vrot.lane.b32.xlu0 %v344, 127
        %v398 = vpop.permute.xlu0 %397
        %399 = vrot.lane.b32.xlu0 %v345, 127
        %v400 = vpop.permute.xlu0 %399
        %401 = vrot.lane.b32.xlu0 %v346, 127
        %v402 = vpop.permute.xlu0 %401
        %vm419 = vcmask 1039360
        %v420 = vsel %vm419, %v372, %v331
        %v421 = vsel %vm419, %v374, %v332
        %v422 = vsel %vm419, %v376, %v333
        %v423 = vsel %vm419, %v378, %v334
        %v424 = vsel %vm419, %v380, %v335
        %v425 = vsel %vm419, %v382, %v336
        %v426 = vsel %vm419, %v384, %v337
        %v427 = vsel %vm419, %v386, %v338
        %v428 = vsel %vm419, %v388, %v339
        %v429 = vsel %vm419, %v390, %v340
        %v430 = vsel %vm419, %v392, %v341
        %v431 = vsel %vm419, %v394, %v342
        %v432 = vsel %vm419, %v396, %v343
        %v433 = vsel %vm419, %v398, %v344
        %v434 = vsel %vm419, %v400, %v345
        %v435 = vsel %vm419, %v402, %v346
        %436 = vrot.lane.b32.xlu0 %v331, 1
        %v437 = vpop.permute.xlu0 %436
        %438 = vrot.lane.b32.xlu0 %v332, 1
        %v439 = vpop.permute.xlu0 %438
        %440 = vrot.lane.b32.xlu0 %v333, 1
        %v441 = vpop.permute.xlu0 %440
        %442 = vrot.lane.b32.xlu0 %v334, 1
        %v443 = vpop.permute.xlu0 %442
        %444 = vrot.lane.b32.xlu0 %v335, 1
        %v445 = vpop.permute.xlu0 %444
        %446 = vrot.lane.b32.xlu0 %v336, 1
        %v447 = vpop.permute.xlu0 %446
        %448 = vrot.lane.b32.xlu0 %v337, 1
        %v449 = vpop.permute.xlu0 %448
        %450 = vrot.lane.b32.xlu0 %v338, 1
        %v451 = vpop.permute.xlu0 %450
        %452 = vrot.lane.b32.xlu0 %v339, 1
        %v453 = vpop.permute.xlu0 %452
        %454 = vrot.lane.b32.xlu0 %v340, 1
        %v455 = vpop.permute.xlu0 %454
        %456 = vrot.lane.b32.xlu0 %v341, 1
        %v457 = vpop.permute.xlu0 %456
        %458 = vrot.lane.b32.xlu0 %v342, 1
        %v459 = vpop.permute.xlu0 %458
        %460 = vrot.lane.b32.xlu0 %v343, 1
        %v461 = vpop.permute.xlu0 %460
        %462 = vrot.lane.b32.xlu0 %v344, 1
        %v463 = vpop.permute.xlu0 %462
        %464 = vrot.lane.b32.xlu0 %v345, 1
        %v465 = vpop.permute.xlu0 %464
        %466 = vrot.lane.b32.xlu0 %v346, 1
        %v467 = vpop.permute.xlu0 %466
        %vm484 = vcmask 7168
        %v485 = vsel %vm484, %v331, %v437
        %v486 = vsel %vm484, %v332, %v439
        %v487 = vsel %vm484, %v333, %v441
        %v488 = vsel %vm484, %v334, %v443
        %v489 = vsel %vm484, %v335, %v445
        %v490 = vsel %vm484, %v336, %v447
        %v491 = vsel %vm484, %v337, %v449
        %v492 = vsel %vm484, %v338, %v451
        %v493 = vsel %vm484, %v339, %v453
        %v494 = vsel %vm484, %v340, %v455
        %v495 = vsel %vm484, %v341, %v457
        %v496 = vsel %vm484, %v342, %v459
        %v497 = vsel %vm484, %v343, %v461
        %v498 = vsel %vm484, %v344, %v463
        %v499 = vsel %vm484, %v345, %v465
        %v500 = vsel %vm484, %v346, %v467
        %v501 = vsub.f32 %v420, %v485
        %v502 = vsub.f32 %v421, %v486
        %v503 = vsub.f32 %v422, %v487
        %v504 = vsub.f32 %v423, %v488
        %v505 = vsub.f32 %v424, %v489
        %v506 = vsub.f32 %v425, %v490
        %v507 = vsub.f32 %v426, %v491
        %v508 = vsub.f32 %v427, %v492
        %v509 = vsub.f32 %v428, %v493
        %v510 = vsub.f32 %v429, %v494
        %v511 = vsub.f32 %v430, %v495
        %v512 = vsub.f32 %v431, %v496
        %v513 = vsub.f32 %v432, %v497
        %v514 = vsub.f32 %v433, %v498
        %v515 = vsub.f32 %v434, %v499
        %v516 = vsub.f32 %v435, %v500
        %v517 = vmul.f32 %v501, 0.5
        %v518 = vmul.f32 %v502, 0.5
        %v519 = vmul.f32 %v503, 0.5
        %v520 = vmul.f32 %v504, 0.5
        %v521 = vmul.f32 %v505, 0.5
        %v522 = vmul.f32 %v506, 0.5
        %v523 = vmul.f32 %v507, 0.5
        %v524 = vmul.f32 %v508, 0.5
        %v525 = vmul.f32 %v509, 0.5
        %v526 = vmul.f32 %v510, 0.5
        %v527 = vmul.f32 %v511, 0.5
        %v528 = vmul.f32 %v512, 0.5
        %v529 = vmul.f32 %v513, 0.5
        %v530 = vmul.f32 %v514, 0.5
        %v531 = vmul.f32 %v515, 0.5
        %v532 = vmul.f32 %v516, 0.5
        %533 = vst [vmem:[%s316] sm:$0xff] %v517
        %534 = vst [vmem:[%s316 + $0x8] sm:$0xff] %v518
        %535 = vst [vmem:[%s316 + $0x10] sm:$0xff] %v519
        %536 = vst [vmem:[%s316 + $0x18] sm:$0xff] %v520
        %537 = vst [vmem:[%s316 + $0x60] sm:$0xff] %v521
        %538 = vst [vmem:[%s316 + $0x68] sm:$0xff] %v522
        %539 = vst [vmem:[%s316 + $0x70] sm:$0xff] %v523
        %540 = vst [vmem:[%s316 + $0x78] sm:$0xff] %v524
        %541 = vst [vmem:[%s316 + $0xc0] sm:$0xff] %v525
        %542 = vst [vmem:[%s316 + $0xc8] sm:$0xff] %v526
        %543 = vst [vmem:[%s316 + $0xd0] sm:$0xff] %v527
        %544 = vst [vmem:[%s316 + $0xd8] sm:$0xff] %v528
        %545 = vst [vmem:[%s316 + $0x120] sm:$0xff] %v529
        %546 = vst [vmem:[%s316 + $0x128] sm:$0xff] %v530
        %547 = vst [vmem:[%s316 + $0x130] sm:$0xff] %v531
        %548 = vst [vmem:[%s316 + $0x138] sm:$0xff] %v532
        %v549 = vrot.slane %v331, 1
        %v550 = vrot.slane %v332, 1
        %v551 = vrot.slane %v333, 1
        %v552 = vrot.slane %v334, 1
        %v553 = vrot.slane %v335, 1
        %v554 = vrot.slane %v336, 1
        %v555 = vrot.slane %v337, 1
        %v556 = vrot.slane %v338, 1
        %v557 = vrot.slane %v339, 1
        %v558 = vrot.slane %v340, 1
        %v559 = vrot.slane %v341, 1
        %v560 = vrot.slane %v342, 1
        %v561 = vrot.slane %v343, 1
        %v562 = vrot.slane %v344, 1
        %v563 = vrot.slane %v345, 1
        %v564 = vrot.slane %v346, 1
        %vm581 = vcmask 1046528
        %v582 = vsel %vm581, %v549, %v331
        %v583 = vsel %vm581, %v550, %v332
        %v584 = vsel %vm581, %v551, %v333
        %v585 = vsel %vm581, %v552, %v334
        %v586 = vsel %vm581, %v553, %v335
        %v587 = vsel %vm581, %v554, %v336
        %v588 = vsel %vm581, %v555, %v337
        %v589 = vsel %vm581, %v556, %v338
        %v590 = vsel %vm581, %v557, %v339
        %v591 = vsel %vm581, %v558, %v340
        %v592 = vsel %vm581, %v559, %v341
        %v593 = vsel %vm581, %v560, %v342
        %v594 = vsel %vm581, %v561, %v343
        %v595 = vsel %vm581, %v562, %v344
        %v596 = vsel %vm581, %v563, %v345
        %v597 = vsel %vm581, %v564, %v346
        %v598 = vrot.slane %v331, 7
        %v599 = vrot.slane %v332, 7
        %v600 = vrot.slane %v333, 7
        %v601 = vrot.slane %v334, 7
        %v602 = vrot.slane %v335, 7
        %v603 = vrot.slane %v336, 7
        %v604 = vrot.slane %v337, 7
        %v605 = vrot.slane %v338, 7
        %v606 = vrot.slane %v339, 7
        %v607 = vrot.slane %v340, 7
        %v608 = vrot.slane %v341, 7
        %v609 = vrot.slane %v342, 7
        %v610 = vrot.slane %v343, 7
        %v611 = vrot.slane %v344, 7
        %v612 = vrot.slane %v345, 7
        %v613 = vrot.slane %v346, 7
        %vm630 = vcmask 1040384
        %v631 = vsel %vm630, %v331, %v598
        %v632 = vsel %vm630, %v332, %v599
        %v633 = vsel %vm630, %v333, %v600
        %v634 = vsel %vm630, %v334, %v601
        %v635 = vsel %vm630, %v335, %v602
        %v636 = vsel %vm630, %v336, %v603
        %v637 = vsel %vm630, %v337, %v604
        %v638 = vsel %vm630, %v338, %v605
        %v639 = vsel %vm630, %v339, %v606
        %v640 = vsel %vm630, %v340, %v607
        %v641 = vsel %vm630, %v341, %v608
        %v642 = vsel %vm630, %v342, %v609
        %v643 = vsel %vm630, %v343, %v610
        %v644 = vsel %vm630, %v344, %v611
        %v645 = vsel %vm630, %v345, %v612
        %v646 = vsel %vm630, %v346, %v613
        %v647 = vsub.f32 %v582, %v631
        %v648 = vsub.f32 %v583, %v632
        %v649 = vsub.f32 %v584, %v633
        %v650 = vsub.f32 %v585, %v634
        %v651 = vsub.f32 %v586, %v635
        %v652 = vsub.f32 %v587, %v636
        %v653 = vsub.f32 %v588, %v637
        %v654 = vsub.f32 %v589, %v638
        %v655 = vsub.f32 %v590, %v639
        %v656 = vsub.f32 %v591, %v640
        %v657 = vsub.f32 %v592, %v641
        %v658 = vsub.f32 %v593, %v642
        %v659 = vsub.f32 %v594, %v643
        %v660 = vsub.f32 %v595, %v644
        %v661 = vsub.f32 %v596, %v645
        %v662 = vsub.f32 %v597, %v646
        %v663 = vmul.f32 %v647, 0.5
        %v664 = vmul.f32 %v648, 0.5
        %v665 = vmul.f32 %v649, 0.5
        %v666 = vmul.f32 %v650, 0.5
        %v667 = vmul.f32 %v651, 0.5
        %v668 = vmul.f32 %v652, 0.5
        %v669 = vmul.f32 %v653, 0.5
        %v670 = vmul.f32 %v654, 0.5
        %v671 = vmul.f32 %v655, 0.5
        %v672 = vmul.f32 %v656, 0.5
        %v673 = vmul.f32 %v657, 0.5
        %v674 = vmul.f32 %v658, 0.5
        %v675 = vmul.f32 %v659, 0.5
        %v676 = vmul.f32 %v660, 0.5
        %v677 = vmul.f32 %v661, 0.5
        %v678 = vmul.f32 %v662, 0.5
        %s679 = scalar_lea.vmem %s316, 32 [#allocation8]
        %680 = vst [vmem:[%s679] sm:$0xff] %v663
        %681 = vst [vmem:[%s679 + $0x8] sm:$0xff] %v664
        %682 = vst [vmem:[%s679 + $0x10] sm:$0xff] %v665
        %683 = vst [vmem:[%s679 + $0x18] sm:$0xff] %v666
        %684 = vst [vmem:[%s679 + $0x60] sm:$0xff] %v667
        %685 = vst [vmem:[%s679 + $0x68] sm:$0xff] %v668
        %686 = vst [vmem:[%s679 + $0x70] sm:$0xff] %v669
        %687 = vst [vmem:[%s679 + $0x78] sm:$0xff] %v670
        %688 = vst [vmem:[%s679 + $0xc0] sm:$0xff] %v671
        %689 = vst [vmem:[%s679 + $0xc8] sm:$0xff] %v672
        %690 = vst [vmem:[%s679 + $0xd0] sm:$0xff] %v673
        %691 = vst [vmem:[%s679 + $0xd8] sm:$0xff] %v674
        %692 = vst [vmem:[%s679 + $0x120] sm:$0xff] %v675
        %693 = vst [vmem:[%s679 + $0x128] sm:$0xff] %v676
        %694 = vst [vmem:[%s679 + $0x130] sm:$0xff] %v677
        %695 = vst [vmem:[%s679 + $0x138] sm:$0xff] %v678
        %v696 = vsub.f32 %v332, %v347
        %v697 = vsub.f32 %v333, %v331
        %v698 = vsub.f32 %v334, %v332
        %v699 = vsub.f32 %v351, %v333
        %v700 = vsub.f32 %v336, %v348
        %v701 = vsub.f32 %v337, %v335
        %v702 = vsub.f32 %v338, %v336
        %v703 = vsub.f32 %v352, %v337
        %v704 = vsub.f32 %v340, %v349
        %v705 = vsub.f32 %v341, %v339
        %v706 = vsub.f32 %v342, %v340
        %v707 = vsub.f32 %v353, %v341
        %v708 = vsub.f32 %v344, %v350
        %v709 = vsub.f32 %v345, %v343
        %v710 = vsub.f32 %v346, %v344
        %v711 = vsub.f32 %v354, %v345
        %v712 = vmul.f32 %v696, 0.5
        %v713 = vmul.f32 %v697, 0.5
        %v714 = vmul.f32 %v698, 0.5
        %v715 = vmul.f32 %v699, 0.5
        %v716 = vmul.f32 %v700, 0.5
        %v717 = vmul.f32 %v701, 0.5
        %v718 = vmul.f32 %v702, 0.5
        %v719 = vmul.f32 %v703, 0.5
        %v720 = vmul.f32 %v704, 0.5
        %v721 = vmul.f32 %v705, 0.5
        %v722 = vmul.f32 %v706, 0.5
        %v723 = vmul.f32 %v707, 0.5
        %v724 = vmul.f32 %v708, 0.5
        %v725 = vmul.f32 %v709, 0.5
        %v726 = vmul.f32 %v710, 0.5
        %v727 = vmul.f32 %v711, 0.5
        %s728 = scalar_lea.vmem %s316, 64 [#allocation8]
        %729 = vst [vmem:[%s728] sm:$0xff] %v712
        %730 = vst [vmem:[%s728 + $0x8] sm:$0xff] %v713
        %731 = vst [vmem:[%s728 + $0x10] sm:$0xff] %v714
        %732 = vst [vmem:[%s728 + $0x18] sm:$0xff] %v715
        %733 = vst [vmem:[%s728 + $0x60] sm:$0xff] %v716
        %734 = vst [vmem:[%s728 + $0x68] sm:$0xff] %v717
        %735 = vst [vmem:[%s728 + $0x70] sm:$0xff] %v718
        %736 = vst [vmem:[%s728 + $0x78] sm:$0xff] %v719
        %737 = vst [vmem:[%s728 + $0xc0] sm:$0xff] %v720
        %738 = vst [vmem:[%s728 + $0xc8] sm:$0xff] %v721
        %739 = vst [vmem:[%s728 + $0xd0] sm:$0xff] %v722
        %740 = vst [vmem:[%s728 + $0xd8] sm:$0xff] %v723
        %741 = vst [vmem:[%s728 + $0x120] sm:$0xff] %v724
        %742 = vst [vmem:[%s728 + $0x128] sm:$0xff] %v725
        %743 = vst [vmem:[%s728 + $0x130] sm:$0xff] %v726
        %744 = vst [vmem:[%s728 + $0x138] sm:$0xff] %v727
        %s745 = sand.u32 %s145, 1
        %s746 = scalar_lea.sflag [#allocation4], %s745
        %s747 = sand.u32 %s145, 1
        %s748 = smul.addr %s747, 384
        %s749 = scalar_lea.vmem [#allocation8], %s748
        // Predicated region
        $region45: #{tpu_custom_call.1} parent=31 // pred_check
          %p750 = pneg %p155
        $region46: #{tpu_custom_call.1} parent=31 // pred_check_branch
          %752 = sbr.rel (%p750) target = $region48
        $region47: #{tpu_custom_call.1} parent=31 // pred_region
          %s753 = smul.u32 4, %s27
          %s754 = smul.u32 4, %s28
          %s756 = ssub.s32 6144, 6144
          %757 = vsyncadd %s746, %s756
          %s758 = smul.addr %s753, 12
          %s759 = sadd.s32 %s754, %s758
          %s760 = smul.addr %s759, 128
          %s761 = scalar_lea.hbm %s3, %s760
          %s762 = sshll.u32 %s749, 4
          %s763 = int_to_ptr.vmem [resolvable:$true] %s762
          %768 = dma.vmem_to_hbm [thread:$0]  %s763, 6144, %s761, %s746, 128, 128, 8
        $region48: #{tpu_custom_call.1} parent=31 // pred_fallthru
          _
      $region32: #{tpu_custom_call.1} parent=5 // pred_fallthru
        _
      %p769 = scmp.le.s32.totalorder 2, %s18
      // Predicated region
      $region49: #{tpu_custom_call.1} parent=5 // pred_check
        %p770 = pneg %p769
      $region50: #{tpu_custom_call.1} parent=5 // pred_check_branch
        %772 = sbr.rel (%p770) target = $region52
      $region51: #{tpu_custom_call.1} parent=5 // pred_region
        %s773 = ssub.s32 %s18, 2
        // Predicated region
        $region53: #{tpu_custom_call.1} parent=51 // pred_check
          %p774 = pneg %p161
        $region54: #{tpu_custom_call.1} parent=51 // pred_check_branch
          %776 = sbr.rel (%p774) target = $region56
        $region55: #{tpu_custom_call.1} parent=51 // pred_region
          %s777 = sand.u32 %s146, 1
          %s778 = scalar_lea.sflag [#allocation4], %s777
          %s779 = sand.u32 %s146, 1
          %s780 = smul.addr %s779, 384
          %s781 = scalar_lea.vmem [#allocation8], %s780
          %782 = dma.done %s778, 6144
        $region56: #{tpu_custom_call.1} parent=51 // pred_fallthru
          _
      $region52: #{tpu_custom_call.1} parent=5 // pred_fallthru
        _
    $region6: #{tpu_custom_call.1} parent=1 // loop_footer
      %s22 = sadd.s32 1, %s18
    $region7: #{tpu_custom_call.1} parent=1 // loop_footer_branch
      %17 = sbr.rel target = $region3
    $region8: #{tpu_custom_call.1} parent=1 // loop_exit
      _
    %783 = vsyncpa [#allocation3], 1
    %s784 = scalar_lea.sflag [#allocation3], 1
    %785 = vsyncpa %s784, 1
    %786 = vsyncpa [#allocation6], 1
    %s787 = scalar_lea.sflag [#allocation6], 1
    %788 = vsyncpa %s787, 1
    %789 = vsyncpa [#allocation4], 1
    %s790 = scalar_lea.sflag [#allocation4], 1
    %791 = vsyncpa %s790, 1

</llo_original>
